<compile_context>
chip_gen: v7x
topology: tpu7x:2x2x1
jax: 0.10.0
libtpu: 0.0.40
codegen_flags: <defaults>
</compile_context>

<pallas_src>
import functools
import math

import jax
import jax.numpy as jnp
from jax.experimental import pallas as pl
from jax.experimental.pallas import tpu as pltpu


# ----------------------------- VMEM budgeting -------------------------------

def _vmem_capacity_bytes():
    try:
        return int(pltpu.get_tpu_info().vmem_capacity_bytes)
    except Exception:
        return 128 * 1024 * 1024   # v5e / v6e physical VMEM


_VMEM_CAP = _vmem_capacity_bytes()
# Larger limit for the reuse-heavy matmuls (v6e feedback), capped at half the
# physical VMEM so v7x (64 MiB/TC) keeps pipelining headroom.
_DENSE_VMEM_LIMIT = min(64 * 1024 * 1024, _VMEM_CAP // 2)
_SMALL_VMEM_LIMIT = min(32 * 1024 * 1024, _VMEM_CAP // 2)

# ----------------------------- tiling helpers -------------------------------
_ROW_TILES = (512, 256, 128, 64, 32, 16, 8)          # sublane-dim candidates
_LANE_TILES = (1024, 512, 256, 128)                  # lane-dim candidates
_ACC_BUDGET_BYTES = 4 * 1024 * 1024                  # f32 accumulator tile cap (v7x)


def _pick(dim, candidates):
    for c in candidates:
        if dim % c == 0:
            return c
    return dim  # full extent is always a legal block


def _matmul_tiles(M, N, K):
    tm, tn, tk = _pick(M, _ROW_TILES), _pick(N, _LANE_TILES), _pick(K, _LANE_TILES)
    # keep the f32 accumulator tile within budget (matters on v7x's 64 MiB VMEM)
    while tm * tn * 4 > _ACC_BUDGET_BYTES:
        if tn > 128 and N % (tn // 2) == 0:
            tn //= 2
        elif tm > 8 and M % (tm // 2) == 0:
            tm //= 2
        else:
            break
    return tm, tn, tk


# ------------------------- tiled dense (bias + GELU) ------------------------

def _dense_kernel(x_ref, w_ref, b_ref, o_ref, acc_ref, *, activation):
    @pl.when(pl.program_id(2) == 0)
    def _init():
        acc_ref[...] = jnp.zeros_like(acc_ref)

    acc_ref[...] += jnp.dot(x_ref[...], w_ref[...],
                            preferred_element_type=jnp.float32)

    @pl.when(pl.program_id(2) == pl.num_programs(2) - 1)
    def _finalize():
        z = acc_ref[...] + b_ref[...]
        if activation == "gelu":
            # TODO(synk): HF BERT uses exact erf-GELU; tanh approximation used here.
            z = 0.5 * z * (1.0 + jnp.tanh(
                math.sqrt(2.0 / math.pi) * (z + 0.044715 * z * z * z)))
        o_ref[...] = z.astype(o_ref.dtype)


def pallas_dense(x, w, b, activation=None, out_dtype=jnp.bfloat16):
    M, K = x.shape
    N = w.shape[1]
    tm, tn, tk = _matmul_tiles(M, N, K)
    kernel = functools.partial(_dense_kernel, activation=activation)
    bytes_accessed = int(x.size * x.dtype.itemsize + w.size * w.dtype.itemsize
                         + b.size * b.dtype.itemsize
                         + M * N * jnp.dtype(out_dtype).itemsize)
    return pl.pallas_call(
        kernel,
        out_shape=jax.ShapeDtypeStruct((M, N), out_dtype),
        grid_spec=pltpu.PrefetchScalarGridSpec(
            num_scalar_prefetch=0,
            grid=(M // tm, N // tn, K // tk),
            in_specs=[
                pl.BlockSpec((tm, tk), lambda i, j, k: (i, k)),
                pl.BlockSpec((tk, tn), lambda i, j, k: (k, j)),
                pl.BlockSpec((1, tn), lambda i, j, k: (0, j)),
            ],
            out_specs=pl.BlockSpec((tm, tn), lambda i, j, k: (i, j)),
            scratch_shapes=[pltpu.VMEM((tm, tn), jnp.float32)],
        ),
        compiler_params=pltpu.CompilerParams(
            dimension_semantics=("parallel", "parallel", "arbitrary"),
            vmem_limit_bytes=_DENSE_VMEM_LIMIT),
        cost_estimate=pl.CostEstimate(
            flops=2 * M * N * K,
            transcendentals=(M * N if activation == "gelu" else 0),
            bytes_accessed=bytes_accessed),
    )(x, w, b)


# ------------- dense fused with bias + residual-add + LayerNorm -------------

def _dense_add_ln_kernel(x_ref, w_ref, b_ref, r_ref, g_ref, be_ref, o_ref,
                         acc_ref, *, eps):
    @pl.when(pl.program_id(1) == 0)
    def _init():
        acc_ref[...] = jnp.zeros_like(acc_ref)

    acc_ref[...] += jnp.dot(x_ref[...], w_ref[...],
                            preferred_element_type=jnp.float32)

    @pl.when(pl.program_id(1) == pl.num_programs(1) - 1)
    def _finalize():
        z = acc_ref[...] + b_ref[...] + r_ref[...].astype(jnp.float32)
        mu = jnp.mean(z, axis=-1, keepdims=True)
        var = jnp.mean((z - mu) * (z - mu), axis=-1, keepdims=True)
        norm = (z - mu) * jax.lax.rsqrt(var + eps)
        o_ref[...] = (norm * g_ref[...] + be_ref[...]).astype(o_ref.dtype)


def pallas_dense_add_ln(x, w, b, residual, gamma, beta, eps=1e-12,
                        out_dtype=jnp.bfloat16):
    """out = LayerNorm(x @ w + b + residual); full output row (tn = N) per block."""
    M, K = x.shape
    N = w.shape[1]
    tm, _, tk = _matmul_tiles(M, N, K)
    kernel = functools.partial(_dense_add_ln_kernel, eps=eps)
    return pl.pallas_call(
        kernel,
        out_shape=jax.ShapeDtypeStruct((M, N), out_dtype),
        grid_spec=pltpu.PrefetchScalarGridSpec(
            num_scalar_prefetch=0,
            grid=(M // tm, K // tk),
            in_specs=[
                pl.BlockSpec((tm, tk), lambda i, k: (i, k)),
                pl.BlockSpec((tk, N), lambda i, k: (k, 0)),
                pl.BlockSpec((1, N), lambda i, k: (0, 0)),
                pl.BlockSpec((tm, N), lambda i, k: (i, 0)),
                pl.BlockSpec((1, N), lambda i, k: (0, 0)),
                pl.BlockSpec((1, N), lambda i, k: (0, 0)),
            ],
            out_specs=pl.BlockSpec((tm, N), lambda i, k: (i, 0)),
            scratch_shapes=[pltpu.VMEM((tm, N), jnp.float32)],
        ),
        compiler_params=pltpu.CompilerParams(
            dimension_semantics=("parallel", "arbitrary"),
            vmem_limit_bytes=_DENSE_VMEM_LIMIT),
        cost_estimate=pl.CostEstimate(
            flops=2 * M * N * K, transcendentals=M,
            bytes_accessed=int(x.size * x.dtype.itemsize
                               + w.size * w.dtype.itemsize + 3 * M * N * 2)),
    )(x, w, b, residual, gamma, beta)


# ------------- classifier dense fused with softmax / cross-entropy ----------

def _cls_softmax_kernel(x_ref, w_ref, b_ref, o_ref, acc_ref):
    @pl.when(pl.program_id(1) == 0)
    def _init():
        acc_ref[...] = jnp.zeros_like(acc_ref)

    acc_ref[...] += jnp.dot(x_ref[...], w_ref[...],
                            preferred_element_type=jnp.float32)

    @pl.when(pl.program_id(1) == pl.num_programs(1) - 1)
    def _finalize():
        logits = acc_ref[...] + b_ref[...]
        m = jnp.max(logits, axis=-1, keepdims=True)
        e = jnp.exp(logits - m)
        o_ref[...] = (e / jnp.sum(e, axis=-1, keepdims=True)).astype(o_ref.dtype)


def _cls_ce_kernel(x_ref, w_ref, b_ref, y_ref, o_ref, acc_ref):
    @pl.when(pl.program_id(1) == 0)
    def _init():
        acc_ref[...] = jnp.zeros_like(acc_ref)

    acc_ref[...] += jnp.dot(x_ref[...], w_ref[...],
                            preferred_element_type=jnp.float32)

    @pl.when(pl.program_id(1) == pl.num_programs(1) - 1)
    def _finalize():
        logits = acc_ref[...] + b_ref[...]
        m = jnp.max(logits, axis=-1, keepdims=True)
        lse = m + jnp.log(jnp.sum(jnp.exp(logits - m), axis=-1, keepdims=True))
        labels = y_ref[...]                                       # (tm, 1) int32
        col = jax.lax.broadcasted_iota(jnp.int32, logits.shape, 1)
        label_logit = jnp.sum(jnp.where(col == labels, logits, 0.0),
                              axis=-1, keepdims=True)
        valid = labels != -100                                    # PyTorch ignore_index
        o_ref[...] = jnp.where(valid, lse - label_logit, 0.0).astype(o_ref.dtype)


def pallas_classifier(x, w, b, labels=None):
    """x @ w + b fused with softmax (labels=None) or per-row cross-entropy."""
    # TODO(synk): for real vocabularies (e.g. 30522) tile the vocab axis with a
    # two-pass (max, lse) accumulation instead of a full-V finalize row.
    M, K = x.shape
    V = w.shape[1]
    tm = _pick(M, _ROW_TILES)
    tk = _pick(K, _LANE_TILES)
    while tm * V * 4 > _ACC_BUDGET_BYTES and tm > 8 and M % (tm // 2) == 0:
        tm //= 2
    x_spec = pl.BlockSpec((tm, tk), lambda i, k: (i, k))
    w_spec = pl.BlockSpec((tk, V), lambda i, k: (k, 0))
    b_spec = pl.BlockSpec((1, V), lambda i, k: (0, 0))
    if labels is None:
        return pl.pallas_call(
            _cls_softmax_kernel,
            out_shape=jax.ShapeDtypeStruct((M, V), jnp.float32),
            grid_spec=pltpu.PrefetchScalarGridSpec(
                num_scalar_prefetch=0,
                grid=(M // tm, K // tk),
                in_specs=[x_spec, w_spec, b_spec],
                out_specs=pl.BlockSpec((tm, V), lambda i, k: (i, 0)),
                scratch_shapes=[pltpu.VMEM((tm, V), jnp.float32)],
            ),
            compiler_params=pltpu.CompilerParams(
                dimension_semantics=("parallel", "arbitrary"),
                vmem_limit_bytes=_DENSE_VMEM_LIMIT),
        )(x, w, b)
    y2d = labels.reshape(M, 1).astype(jnp.int32)
    return pl.pallas_call(
        _cls_ce_kernel,
        out_shape=jax.ShapeDtypeStruct((M, 1), jnp.float32),
        grid_spec=pltpu.PrefetchScalarGridSpec(
            num_scalar_prefetch=0,
            grid=(M // tm, K // tk),
            in_specs=[x_spec, w_spec, b_spec,
                      pl.BlockSpec((tm, 1), lambda i, k: (i, 0))],
            out_specs=pl.BlockSpec((tm, 1), lambda i, k: (i, 0)),
            scratch_shapes=[pltpu.VMEM((tm, V), jnp.float32)],
        ),
        compiler_params=pltpu.CompilerParams(
            dimension_semantics=("parallel", "arbitrary"),
            vmem_limit_bytes=_DENSE_VMEM_LIMIT),
    )(x, w, b, y2d)


# ---------------------- LayerNorm (embedding path only) ---------------------

def _ln_kernel(x_ref, g_ref, b_ref, o_ref, *, eps):
    x = x_ref[...].astype(jnp.float32)
    mu = jnp.mean(x, axis=-1, keepdims=True)
    var = jnp.mean((x - mu) * (x - mu), axis=-1, keepdims=True)
    o_ref[...] = ((x - mu) * jax.lax.rsqrt(var + eps) * g_ref[...]
                  + b_ref[...]).astype(o_ref.dtype)


def pallas_layernorm(x, gamma, beta, eps=1e-12, out_dtype=jnp.bfloat16):
    M, H = x.shape
    tm = _pick(M, _ROW_TILES)
    row_spec = pl.BlockSpec((tm, H), lambda i: (i, 0))
    vec_spec = pl.BlockSpec((1, H), lambda i: (0, 0))
    return pl.pallas_call(
        functools.partial(_ln_kernel, eps=eps),
        out_shape=jax.ShapeDtypeStruct((M, H), out_dtype),
        grid=(M // tm,),
        in_specs=[row_spec, vec_spec, vec_spec],
        out_specs=row_spec,
        compiler_params=pltpu.CompilerParams(
            dimension_semantics=("parallel",),
            vmem_limit_bytes=_SMALL_VMEM_LIMIT),
    )(x, gamma, beta)


# ------------------ attention (fused QKV in, heads split in-kernel) ---------

def _attention_kernel(qkv_ref, o_ref, *, num_heads, head_dim, hidden):
    # 1/sqrt(head_dim) is folded into the Q columns of wqkv at init; softmax
    # normalization is deferred to the (S, head_dim) context.
    qkv = qkv_ref[0]                               # (S, 3H) bf16
    for h in range(num_heads):
        lo = h * head_dim
        q = qkv[:, lo:lo + head_dim]
        k = qkv[:, hidden + lo:hidden + lo + head_dim]
        v = qkv[:, 2 * hidden + lo:2 * hidden + lo + head_dim]
        # contract last axes directly -> no explicit K transpose on the XLU
        s = jax.lax.dot_general(q, k, (((1,), (1,)), ((), ())),
                                preferred_element_type=jnp.float32)
        m = jnp.max(s, axis=-1, keepdims=True)
        p = jnp.exp(s - m)
        ctx = jnp.dot(p.astype(v.dtype), v, preferred_element_type=jnp.float32)
        inv = pl.reciprocal(jnp.sum(p, axis=-1, keepdims=True), approx=True)
        # write this head's context straight into its output window: no concat,
        # no per-head f32 intermediates kept live across heads.
        o_ref[0, :, lo:lo + head_dim] = (ctx * inv).astype(o_ref.dtype)


def pallas_attention(qkv, B, S, num_heads, head_dim, hidden):
    # TODO(synk): for long sequences use a flash-style online softmax over KV tiles,
    # and move heads onto the grid with a head-major QKV layout (needs a relayout
    # kernel since 3*head_dim windows are not 128-lane aligned).
    qkv3 = qkv.reshape(B, S, 3 * hidden)           # layout-preserving reshape
    kernel = functools.partial(_attention_kernel, num_heads=num_heads,
                               head_dim=head_dim, hidden=hidden)
    out = pl.pallas_call(
        kernel,
        out_shape=jax.ShapeDtypeStruct((B, S, hidden), jnp.bfloat16),
        grid=(B,),
        in_specs=[pl.BlockSpec((1, S, 3 * hidden), lambda b: (b, 0, 0))],
        out_specs=pl.BlockSpec((1, S, hidden), lambda b: (b, 0, 0)),
        compiler_params=pltpu.CompilerParams(
            dimension_semantics=("parallel",),
            vmem_limit_bytes=_SMALL_VMEM_LIMIT),
    )(qkv3)
    return out.reshape(B * S, hidden)


# ------------------------------ model (glue) --------------------------------

def init_params(key, cfg):
    H, V, I = cfg["hidden"], cfg["vocab"], cfg["inter"]
    L, P, nh = cfg["layers"], cfg["max_pos"], cfg["heads"]
    hd = H // nh
    keys = iter(jax.random.split(key, 8 + 8 * L))

    def w32(shape):
        return jax.random.normal(next(keys), shape, jnp.float32) * 0.02

    zeros = lambda s: jnp.zeros(s, jnp.float32)
    ones = lambda s: jnp.ones(s, jnp.float32)

    params = {
        # embeddings stored bf16: halves gather HBM traffic; LN stats stay f32
        "word_emb": w32((V, H)).astype(jnp.bfloat16),
        "pos_emb": w32((P, H)).astype(jnp.bfloat16),
        "type_emb": w32((2, H)).astype(jnp.bfloat16),
        "emb_ln_g": ones((1, H)), "emb_ln_b": zeros((1, H)),
        "cls_w": w32((H, V)).astype(jnp.bfloat16), "cls_b": zeros((1, V)),
        "layers": [],
    }
    inv_sqrt_hd = 1.0 / math.sqrt(hd)
    for _ in range(L):
        wqkv = w32((H, 3 * H))
        wqkv = wqkv.at[:, :H].multiply(inv_sqrt_hd)     # fold attention scale into Q
        bqkv = zeros((1, 3 * H)).at[:, :H].multiply(inv_sqrt_hd)
        params["layers"].append({
            "wqkv": wqkv.astype(jnp.bfloat16), "bqkv": bqkv,          # fused Q|K|V
            "wo": w32((H, H)).astype(jnp.bfloat16), "bo": zeros((1, H)),
            "ln1_g": ones((1, H)), "ln1_b": zeros((1, H)),
            "wi": w32((H, I)).astype(jnp.bfloat16), "bi": zeros((1, I)),
            "wo2": w32((I, H)).astype(jnp.bfloat16), "bo2": zeros((1, H)),
            "ln2_g": ones((1, H)), "ln2_b": zeros((1, H)),
        })
    return params


def bert_layer(h, p, B, S, cfg):
    H, nh = cfg["hidden"], cfg["heads"]
    hd = H // nh
    qkv = pallas_dense(h, p["wqkv"], p["bqkv"])                  # (B*S, 3H) bf16
    ctx = pallas_attention(qkv, B, S, nh, hd, H)                 # (B*S, H)  bf16
    # out-proj + residual + LayerNorm fused (saves an (M, H) HBM round trip)
    h1 = pallas_dense_add_ln(ctx, p["wo"], p["bo"], residual=h,
                             gamma=p["ln1_g"], beta=p["ln1_b"])
    inter = pallas_dense(h1, p["wi"], p["bi"], activation="gelu")
    h2 = pallas_dense_add_ln(inter, p["wo2"], p["bo2"], residual=h1,
                             gamma=p["ln2_g"], beta=p["ln2_b"])
    return h2


def language_model_forward(params, x_ids, cfg, y=None):
    """x_ids: (B, S) int32 token ids -> softmax probs (B, S, V) or scalar CE loss."""
    B, S = x_ids.shape
    H, V = cfg["hidden"], cfg["vocab"]

    # BERT embeddings (gathers stay in plain JAX); bf16 add, f32 LN stats.
    # TODO(synk): no attention_mask handling (reference call passes none).
    we = jnp.take(params["word_emb"], x_ids, axis=0)             # (B, S, H) bf16
    pe = params["pos_emb"][:S][None, :, :]                       # (1, S, H)
    te = params["type_emb"][0][None, None, :]                    # token_type_ids = 0
    emb = (we + pe + te).reshape(B * S, H)                       # bf16

    h = pallas_layernorm(emb, params["emb_ln_g"], params["emb_ln_b"])

    for layer_params in params["layers"]:
        h = bert_layer(h, layer_params, B, S, cfg)

    # nn.Dropout(0.1) is defined but not applied in the reference forward; no-op.
    if y is None:
        probs = pallas_classifier(h, params["cls_w"], params["cls_b"])   # (B*S, V) f32
        return probs.reshape(B, S, V)
    y_flat = y.reshape(-1)
    per_row = pallas_classifier(h, params["cls_w"], params["cls_b"],
                                labels=y_flat)                           # (B*S, 1) f32
    valid = (y_flat != -100).astype(jnp.float32)                         # ignore_index
    return jnp.sum(per_row[:, 0]) / jnp.maximum(jnp.sum(valid), 1.0)


# --------------------------------- driver -----------------------------------

if __name__ == "__main__":
    cfg = dict(vocab=128, hidden=32, heads=2, layers=2, inter=64, max_pos=64)

    root = jax.random.PRNGKey(0)
    k_params, k_x, k_y = jax.random.split(root, 3)

    params = init_params(k_params, cfg)
    x = jax.random.randint(k_x, (2, 8), 0, cfg["vocab"], dtype=jnp.int32)   # (B=2, S=8)
    y = jax.random.randint(k_y, (2, 8), 0, cfg["vocab"], dtype=jnp.int32)

    probs = language_model_forward(params, x, cfg, y=None)   # (2, 8, 128) softmax probs
    loss = language_model_forward(params, x, cfg, y=y)       # scalar mean cross-entropy
    jax.block_until_ready((probs, loss))

    assert probs.shape == (2, 8, cfg["vocab"])
    assert bool(jnp.all(jnp.isfinite(probs))) and bool(jnp.isfinite(loss))
    assert bool(jnp.allclose(jnp.sum(probs, axis=-1), 1.0, atol=1e-2))
    print("KERNEL_OK")
</pallas_src>

<mosaic_0001>
module attributes {stable_mosaic.version = 11 : i64} {
  func.func @_ln_kernel(%arg0: i32, %arg1: memref<16x32xbf16, #tpu.memory_space<vmem>>, %arg2: memref<1x32xf32, #tpu.memory_space<vmem>>, %arg3: memref<1x32xf32, #tpu.memory_space<vmem>>, %arg4: memref<16x32xbf16, #tpu.memory_space<vmem>>) attributes {dimension_semantics = [#tpu.dimension_semantics<parallel>], iteration_bounds = array<i64: 1>, scalar_prefetch = 0 : i64, scratch_operands = 0 : i64, tpu.core_type = #tpu.core_type<tc>, window_params = [{transform_indices = @transform_0, window_bounds = array<i64: 16, 32>}, {pipeline_mode = #tpu.pipeline_mode<synchronous>, transform_indices = @transform_1, window_bounds = array<i64: 1, 32>}, {pipeline_mode = #tpu.pipeline_mode<synchronous>, transform_indices = @transform_2, window_bounds = array<i64: 1, 32>}, {transform_indices = @transform_3, window_bounds = array<i64: 16, 32>}]} {
    %c0 = arith.constant 0 : index
    %c0_0 = arith.constant 0 : index
    %0 = vector.load %arg1[%c0, %c0_0] : memref<16x32xbf16, #tpu.memory_space<vmem>>, vector<16x32xbf16>
    %1 = arith.extf %0 : vector<16x32xbf16> to vector<16x32xf32>
    %cst = arith.constant dense<0.000000e+00> : vector<16xf32>
    %2 = vector.multi_reduction <add>, %1, %cst [1] : vector<16x32xf32> to vector<16xf32>
    %3 = vector.shape_cast %2 : vector<16xf32> to vector<16x1xf32>
    %cst_1 = arith.constant 3.200000e+01 : f32
    %4 = vector.broadcast %cst_1 : f32 to vector<16x1xf32>
    %5 = arith.divf %3, %4 : vector<16x1xf32>
    %6 = vector.broadcast %5 : vector<16x1xf32> to vector<16x32xf32>
    %7 = arith.subf %1, %6 : vector<16x32xf32>
    %8 = vector.broadcast %5 : vector<16x1xf32> to vector<16x32xf32>
    %9 = arith.subf %1, %8 : vector<16x32xf32>
    %10 = arith.mulf %7, %9 : vector<16x32xf32>
    %cst_2 = arith.constant dense<0.000000e+00> : vector<16xf32>
    %11 = vector.multi_reduction <add>, %10, %cst_2 [1] : vector<16x32xf32> to vector<16xf32>
    %12 = vector.shape_cast %11 : vector<16xf32> to vector<16x1xf32>
    %cst_3 = arith.constant 3.200000e+01 : f32
    %13 = vector.broadcast %cst_3 : f32 to vector<16x1xf32>
    %14 = arith.divf %12, %13 : vector<16x1xf32>
    %15 = vector.broadcast %5 : vector<16x1xf32> to vector<16x32xf32>
    %16 = arith.subf %1, %15 : vector<16x32xf32>
    %cst_4 = arith.constant 9.99999996E-13 : f32
    %17 = vector.broadcast %cst_4 : f32 to vector<16x1xf32>
    %18 = arith.addf %14, %17 : vector<16x1xf32>
    %19 = math.rsqrt %18 : vector<16x1xf32>
    %20 = vector.broadcast %19 : vector<16x1xf32> to vector<16x32xf32>
    %21 = arith.mulf %16, %20 : vector<16x32xf32>
    %c0_5 = arith.constant 0 : index
    %c0_6 = arith.constant 0 : index
    %22 = vector.load %arg2[%c0_5, %c0_6] : memref<1x32xf32, #tpu.memory_space<vmem>>, vector<1x32xf32>
    %23 = vector.broadcast %22 : vector<1x32xf32> to vector<16x32xf32>
    %24 = arith.mulf %21, %23 : vector<16x32xf32>
    %c0_7 = arith.constant 0 : index
    %c0_8 = arith.constant 0 : index
    %25 = vector.load %arg3[%c0_7, %c0_8] : memref<1x32xf32, #tpu.memory_space<vmem>>, vector<1x32xf32>
    %26 = vector.broadcast %25 : vector<1x32xf32> to vector<16x32xf32>
    %27 = arith.addf %24, %26 : vector<16x32xf32>
    %28 = arith.truncf %27 : vector<16x32xf32> to vector<16x32xbf16>
    %c0_9 = arith.constant 0 : index
    %c0_10 = arith.constant 0 : index
    %29 = vector.load %arg4[%c0_9, %c0_10] : memref<16x32xbf16, #tpu.memory_space<vmem>>, vector<16x32xbf16>
    tpu.vector_store %arg4[%c0_9, %c0_10], %28 {strides = array<i32>} : memref<16x32xbf16, #tpu.memory_space<vmem>>, vector<16x32xbf16>,
    return
  }
  func.func @transform_0(%arg0: i32) -> (i32, i32) {
    %c0_i32 = arith.constant 0 : i32
    %c0_i32_0 = arith.constant 0 : i32
    return %arg0, %c0_i32 : i32, i32
  }
  func.func @transform_1(%arg0: i32) -> (i32, i32) {
    %c0_i32 = arith.constant 0 : i32
    %c0_i32_0 = arith.constant 0 : i32
    %c0_i32_1 = arith.constant 0 : i32
    return %c0_i32, %c0_i32_0 : i32, i32
  }
  func.func @transform_2(%arg0: i32) -> (i32, i32) {
    %c0_i32 = arith.constant 0 : i32
    %c0_i32_0 = arith.constant 0 : i32
    %c0_i32_1 = arith.constant 0 : i32
    return %c0_i32, %c0_i32_0 : i32, i32
  }
  func.func @transform_3(%arg0: i32) -> (i32, i32) {
    %c0_i32 = arith.constant 0 : i32
    %c0_i32_0 = arith.constant 0 : i32
    return %arg0, %c0_i32 : i32, i32
  }
}

</mosaic_0001>

<llo_original>
// kernel: tpu_custom_call.1
$region0: #{tpu_custom_call.1}
  #allocation0 [shape = 'u32[]', space=smem, size = 0x4, offset = 0x4, fixed_abs, tag = 'smem constant byte address 0x4 - core index']
  #allocation1 [shape = 'u32[144,128]{1,0:T(1,128)}', space=vmem, size = 0x12000, scoped, tag = 'internal scratch']
  %s0 = inlined_call_operand.hbm [shape: bf16[16,32], index: 0, kind: input, shape index: {}]
  %s1 = inlined_call_operand.vmem [shape: f32[1,32], index: 1, kind: input, shape index: {}]
  %s2 = inlined_call_operand.vmem [shape: f32[1,32], index: 2, kind: input, shape index: {}]
  %s3 = inlined_call_operand.hbm [shape: bf16[16,32], index: 3, kind: output, shape index: {}]
  %s4 = sld [smem:[#allocation0]]
  $region26: #{tpu_custom_call.1} parent=0
    _
  %s6 = ssub.s32 1, %s4
  %s7 = scalar_select 0, %s6, %s4
  $region1: #{tpu_custom_call.1} parent=0
    #allocation2 [shape = 'u8[4096]{0}', space=vmem, size = 0x1000, scoped, tag = 'input window, operand 0, single buffered']
    #allocation3 [shape = 's32[1]{0}', space=sflag, size = 0x4, scoped, tag = 'scoped memory for tpu_custom_call.1']
    #allocation4 [shape = 's32[1]{0}', space=sflag, size = 0x4, scoped, tag = 'scoped memory for tpu_custom_call.1']
    #allocation5 [shape = 'u8[4096]{0}', space=vmem, size = 0x1000, scoped, tag = 'output window, operand 0, single buffered']
    %8 = vsyncpa [#allocation3], 0
    %9 = vsyncpa [#allocation4], 0
    // Predicated region
    $region2: #{tpu_custom_call.1} parent=1 // pred_check
      _
    $region3: #{tpu_custom_call.1} parent=1 // pred_check_branch
      %11 = sbr.rel (0) target = $region5
    $region4: #{tpu_custom_call.1} parent=1 // pred_region
      %s13 = ssub.s32 128, 128
      %14 = vsyncadd [#allocation3], %s13
      %s15 = sshll.u32 [#allocation2], 4
      %s16 = int_to_ptr.vmem [resolvable:$true] %s15
      %21 = dma.hbm_to_vmem [thread:$0]  %s0, 128, %s16, [#allocation3], 64, 64, 4
    $region5: #{tpu_custom_call.1} parent=1 // pred_fallthru
      _
    // Predicated region
    $region6: #{tpu_custom_call.1} parent=1 // pred_check
      _
    $region7: #{tpu_custom_call.1} parent=1 // pred_check_branch
      %23 = sbr.rel (0) target = $region9
    $region8: #{tpu_custom_call.1} parent=1 // pred_region
      _
    $region9: #{tpu_custom_call.1} parent=1 // pred_fallthru
      _
    // Predicated region
    $region10: #{tpu_custom_call.1} parent=1 // pred_check
      _
    $region11: #{tpu_custom_call.1} parent=1 // pred_check_branch
      %25 = sbr.rel (0) target = $region13
    $region12: #{tpu_custom_call.1} parent=1 // pred_region
      _
    $region13: #{tpu_custom_call.1} parent=1 // pred_fallthru
      _
    // Predicated region
    $region14: #{tpu_custom_call.1} parent=1 // pred_check
      _
    $region15: #{tpu_custom_call.1} parent=1 // pred_check_branch
      %27 = sbr.rel (0) target = $region17
    $region16: #{tpu_custom_call.1} parent=1 // pred_region
      %28 = dma.done [#allocation3], 128
    $region17: #{tpu_custom_call.1} parent=1 // pred_fallthru
      _
    %v29 = vld [vmem:[#allocation2] sm:$0xf]
    %v30 = vld [vmem:[#allocation2 + $0x4] sm:$0xf]
    %v31 = vunpack.c.l.bf16 %v29
    %v32 = vunpack.c.l.bf16 %v30
    %vm33 = vcmask 261120
    %v34 = vsel %vm33, %v31, 0.0
    %35 = vadd.xlane.f32.xlu0 %v34
    %v36 = vpop.xlane.xlu0 %35
    %v37 = vsel %vm33, %v32, 0.0
    %38 = vadd.xlane.f32.xlu0 %v37
    %v39 = vpop.xlane.xlu0 %38
    %v40 = vrcp.pop 32.0
    %v41 = vmul.f32 %v36, %v40
    %v42 = vmul.f32 %v39, %v40
    %v43 = vsub.f32 %v31, %v41
    %v44 = vsub.f32 %v32, %v42
    %v45 = vmul.f32 %v43, %v43
    %v46 = vmul.f32 %v44, %v44
    %v47 = vsel %vm33, %v45, 0.0
    %48 = vadd.xlane.f32.xlu0 %v47
    %v49 = vpop.xlane.xlu0 %48
    %v50 = vsel %vm33, %v46, 0.0
    %51 = vadd.xlane.f32.xlu0 %v50
    %v52 = vpop.xlane.xlu0 %51
    %v53 = vmul.f32 %v49, %v40
    %v54 = vmul.f32 %v52, %v40
    %v55 = vadd.f32 %v53, 1e-12
    %v56 = vadd.f32 %v54, 1e-12
    %v57 = vrsqrt.pop %v55
    %v58 = vrsqrt.pop %v56
    %v59 = vmul.f32 %v43, %v57
    %v60 = vmul.f32 %v44, %v58
    %v61 = vld [vmem:[%s1] sm:$0x1]
    %v63 = vlaneseq
    %v64 = vshrl.u32 %v63, 7
    %v65 = vsub.s32 0, %v64
    %v66 = vrot.slane %v61, %v65
    %v68 = vmul.f32 %v59, %v66
    %v69 = vmul.f32 %v60, %v66
    %v70 = vld [vmem:[%s2] sm:$0x1]
    %v72 = vlaneseq
    %v73 = vshrl.u32 %v72, 7
    %v74 = vsub.s32 0, %v73
    %v75 = vrot.slane %v70, %v74
    %v77 = vadd.f32 %v68, %v75
    %v78 = vadd.f32 %v69, %v75
    %v79 = vpack.c.bf16 %v78, %v77
    %v81 = vunpack.c.l.b16 %v79
    %v82 = vunpack.c.h.b16 %v79
    %v83 = vpack.c.b16 %v81, %v81
    %v84 = vpack.c.b16 %v82, %v82
    %vm87 = vcmask 257024
    %88 = vst.msk [vmem:[#allocation5] sm:$0xf] %vm87, %v83
    %89 = vst.msk [vmem:[#allocation5 + $0x4] sm:$0xf] %vm87, %v84
    // Predicated region
    $region18: #{tpu_custom_call.1} parent=1 // pred_check
      _
    $region19: #{tpu_custom_call.1} parent=1 // pred_check_branch
      %91 = sbr.rel (0) target = $region21
    $region20: #{tpu_custom_call.1} parent=1 // pred_region
      %s93 = ssub.s32 128, 128
      %94 = vsyncadd [#allocation4], %s93
      %s95 = sshll.u32 [#allocation5], 4
      %s96 = int_to_ptr.vmem [resolvable:$true] %s95
      %101 = dma.vmem_to_hbm [thread:$0]  %s96, 128, %s3, [#allocation4], 64, 64, 4
    $region21: #{tpu_custom_call.1} parent=1 // pred_fallthru
      _
    // Predicated region
    $region22: #{tpu_custom_call.1} parent=1 // pred_check
      _
    $region23: #{tpu_custom_call.1} parent=1 // pred_check_branch
      %103 = sbr.rel (0) target = $region25
    $region24: #{tpu_custom_call.1} parent=1 // pred_region
      %104 = dma.done [#allocation4], 128
    $region25: #{tpu_custom_call.1} parent=1 // pred_fallthru
      _
    %105 = vsyncpa [#allocation3], 1
    %106 = vsyncpa [#allocation4], 1

</llo_original>
